<compile_context>
chip_gen: v7x
topology: tpu7x:2x2x1
jax: 0.10.0
libtpu: 0.0.40
codegen_flags: <defaults>
</compile_context>

<pallas_src>
import numpy as np
import jax
import jax.numpy as jnp
from jax.experimental import pallas as pl
from jax.experimental.pallas import tpu as pltpu

_DEG2RAD = np.float32(np.pi / 180.0)
_EPS = np.float32(1e-3)


def _round_up(x, m):
    return ((x + m - 1) // m) * m


def _unit_cell_kernel(mu_ref, sigma_ref, eps_ref, b_ref):
    """Reparameterized sampling + theta_to_B, elementwise on the VPU, lane-dense."""
    eps = eps_ref[...]                       # (6, TN)

    def theta_row(k):
        # SMEM scalar + SMEM scalar * lane-dense row  -> (1, TN)
        return mu_ref[k] + sigma_ref[k] * eps[k:k + 1, :]

    a = jnp.maximum(theta_row(0), _EPS)
    b = jnp.maximum(theta_row(1), _EPS)
    c = jnp.maximum(theta_row(2), _EPS)
    alpha = theta_row(3) * _DEG2RAD
    beta = theta_row(4) * _DEG2RAD
    gamma = theta_row(5) * _DEG2RAD

    cos_a = jnp.cos(alpha)
    cos_b = jnp.cos(beta)
    cos_g = jnp.cos(gamma)
    sin_g = jnp.sin(gamma)

    vol_t = (1.0 - cos_a * cos_a - cos_b * cos_b - cos_g * cos_g
             + 2.0 * cos_a * cos_b * cos_g)
    vol_t = jnp.maximum(vol_t, _EPS)
    V = jnp.maximum(a * b * c * jnp.sqrt(vol_t), _EPS)
    # Floor |sin_g| at eps keeping the sign; where() (not sign()*clamp) so sin_g == 0
    # exactly cannot stay 0 and blow up the divisions.
    sin_g = jnp.where(sin_g >= 0.0, jnp.maximum(sin_g, _EPS),
                      jnp.minimum(sin_g, -_EPS))

    # Hoisted reciprocals (4 divides total); everything else is multiplies.
    inv_a = 1.0 / a
    inv_b = 1.0 / b
    inv_sg = 1.0 / sin_g
    inv_V = 1.0 / V

    d = cos_a - cos_b * cos_g                # shared subexpression
    bc = b * c

    inv00 = inv_a                                                    # A_inv[0,0]
    inv01 = -cos_g * inv_a * inv_sg                                  # A_inv[0,1]
    inv02 = (bc * cos_g * d * inv_sg - bc * cos_b * sin_g) * inv_V   # A_inv[0,2]
    inv11 = inv_b * inv_sg                                           # A_inv[1,1]
    inv12 = -(a * c) * d * inv_V * inv_sg                            # A_inv[1,2]
    inv22 = a * b * sin_g * inv_V                                    # A_inv[2,2]

    zero = jnp.zeros_like(inv00)

    # B = A_inv.T flattened row-major over (3, 3); each write is a full-lane-width
    # sublane-row store (no lane concat, no masked partial stores).
    b_ref[0:1, :] = inv00   # B[0,0]
    b_ref[1:2, :] = zero    # B[0,1]
    b_ref[2:3, :] = zero    # B[0,2]
    b_ref[3:4, :] = inv01   # B[1,0]
    b_ref[4:5, :] = inv11   # B[1,1]
    b_ref[5:6, :] = zero    # B[1,2]
    b_ref[6:7, :] = inv02   # B[2,0]
    b_ref[7:8, :] = inv12   # B[2,1]
    b_ref[8:9, :] = inv22   # B[2,2]


def unit_cell_forward(q_mu, q_logS, eps, *, tile_n=8192):
    """Pallas-backed equivalent of UnitCell.forward() (isParam=True branch).

    q_mu, q_logS : (6,) variational parameters
    eps          : (num_samples, 6) standard-normal noise (stands in for rsample's eps)
    Returns (B, q_mu, q_logS) with B of shape (num_samples, 3, 3).

    Note: for the module default num_samples=3 a fused pure-JAX path would be faster
    (pallas_call launch overhead dominates); the Pallas path is exercised here regardless
    and scales to large N via the gridded pipeline.
    """
    q_mu = q_mu.reshape(6).astype(jnp.float32)
    q_logS = q_logS.reshape(6).astype(jnp.float32)
    sigma = jnp.sqrt(jnp.exp(q_logS))            # hoisted out of the kernel

    n = eps.shape[0]
    eps_t = eps.astype(jnp.float32).T            # (6, n) -- lane-dense layout plumbing

    # Tile the sample axis in multiples of 128 lanes; pad to a whole number of tiles.
    tn = min(int(tile_n), _round_up(max(n, 1), 128))
    tn = _round_up(tn, 128)
    n_pad = _round_up(n, tn)
    if n_pad != n:
        eps_t = jnp.pad(eps_t, ((0, 0), (0, n_pad - n)))   # eps=0 -> theta=mu (safe)

    b_t = pl.pallas_call(
        _unit_cell_kernel,
        out_shape=jax.ShapeDtypeStruct((9, n_pad), jnp.float32),
        grid=(n_pad // tn,),
        in_specs=[
            pl.BlockSpec(memory_space=pltpu.MemorySpace.SMEM),  # mu (6,), resident
            pl.BlockSpec(memory_space=pltpu.MemorySpace.SMEM),  # sigma (6,), resident
            pl.BlockSpec((6, tn), lambda i: (0, i)),            # eps tile, double-buffered
        ],
        out_specs=pl.BlockSpec((9, tn), lambda i: (0, i)),
        compiler_params=pltpu.CompilerParams(
            dimension_semantics=("parallel",)),                 # shard N across TCs on v7x
    )(q_mu, sigma, eps_t)

    B = b_t[:, :n].T.reshape(n, 3, 3)
    return B, q_mu, q_logS


# TODO(synk): torch.distributions Normal objects (p_dist / q_dist) have no kernel
# equivalent; only the reparameterized-sample math is implemented, with the noise
# supplied explicitly as `eps`. The isParam=False branch is the same kernel with
# sigma=0 and eps=zeros((1, 6)).


def _reference_forward(q_mu, q_logS, eps):
    """Pure-JAX reference (mirrors the PyTorch theta_to_B) for verification."""
    sigma = jnp.sqrt(jnp.exp(q_logS))
    theta = q_mu[None, :] + sigma[None, :] * eps
    a = jnp.maximum(theta[:, 0], _EPS)
    b = jnp.maximum(theta[:, 1], _EPS)
    c = jnp.maximum(theta[:, 2], _EPS)
    alpha = jnp.deg2rad(theta[:, 3])
    beta = jnp.deg2rad(theta[:, 4])
    gamma = jnp.deg2rad(theta[:, 5])
    ca, cb, cg, sg = jnp.cos(alpha), jnp.cos(beta), jnp.cos(gamma), jnp.sin(gamma)
    vol_t = jnp.maximum(1 - ca**2 - cb**2 - cg**2 + 2 * ca * cb * cg, _EPS)
    V = jnp.maximum(a * b * c * jnp.sqrt(vol_t), _EPS)
    # Same NaN-safe floor as the kernel (differs from torch only when sg == 0 exactly,
    # where torch produces NaN).
    sg = jnp.where(sg >= 0.0, jnp.maximum(sg, _EPS), jnp.minimum(sg, -_EPS))
    n = theta.shape[0]
    A_inv = jnp.zeros((n, 3, 3), jnp.float32)
    A_inv = A_inv.at[:, 0, 0].set(1 / a)
    A_inv = A_inv.at[:, 0, 1].set(-cg / (a * sg))
    A_inv = A_inv.at[:, 0, 2].set((b * cg * c * (ca - cb * cg) / sg - b * c * cb * sg) / V)
    A_inv = A_inv.at[:, 1, 1].set(1 / (b * sg))
    A_inv = A_inv.at[:, 1, 2].set(-a * c * (ca - cb * cg) / (V * sg))
    A_inv = A_inv.at[:, 2, 2].set(a * b * sg / V)
    return jnp.swapaxes(A_inv, -1, -2)


if __name__ == "__main__":
    # Deterministic parameter init (module defaults).
    q_mu = jnp.array([86.22, 95.07, 117.53, 89.985, 93.626, 95.41], dtype=jnp.float32)
    diag_S = jnp.array([48.275, 49.23, 75.38, 2.81, 8.2, 11.98], dtype=jnp.float32)
    q_logS = jnp.log(diag_S)

    key = jax.random.PRNGKey(0)
    k1, k2 = jax.random.split(key)

    # Module default: num_samples = 3 (single padded 128-lane tile).
    eps_small = jax.random.normal(k1, (3, 6), dtype=jnp.float32)
    B_small, mu_out, logS_out = unit_cell_forward(q_mu, q_logS, eps_small)
    jax.block_until_ready(B_small)
    np.testing.assert_allclose(
        np.asarray(B_small), np.asarray(_reference_forward(q_mu, q_logS, eps_small)),
        rtol=1e-5, atol=1e-6)
    assert B_small.shape == (3, 3, 3)

    # Larger sample count exercising the gridded / padded / multi-tile path (grid = 4).
    eps_big = jax.random.normal(k2, (1000, 6), dtype=jnp.float32)
    B_big, _, _ = unit_cell_forward(q_mu, q_logS, eps_big, tile_n=256)
    jax.block_until_ready(B_big)
    np.testing.assert_allclose(
        np.asarray(B_big), np.asarray(_reference_forward(q_mu, q_logS, eps_big)),
        rtol=1e-5, atol=1e-6)
    assert B_big.shape == (1000, 3, 3)

    print("KERNEL_OK")
</pallas_src>

<mosaic_0001>
module attributes {stable_mosaic.version = 11 : i64} {
  func.func @_unit_cell_kernel(%arg0: i32, %arg1: memref<6xf32, #tpu.memory_space<smem>>, %arg2: memref<6xf32, #tpu.memory_space<smem>>, %arg3: memref<6x128xf32, #tpu.memory_space<vmem>>, %arg4: memref<9x128xf32, #tpu.memory_space<vmem>>) attributes {dimension_semantics = [#tpu.dimension_semantics<parallel>], iteration_bounds = array<i64: 1>, scalar_prefetch = 0 : i64, scratch_operands = 0 : i64, tpu.core_type = #tpu.core_type<tc>, window_params = [{transform_indices = @transform_0, window_bounds = array<i64: 6>}, {transform_indices = @transform_1, window_bounds = array<i64: 6>}, {transform_indices = @transform_2, window_bounds = array<i64: 6, 128>}, {transform_indices = @transform_3, window_bounds = array<i64: 9, 128>}]} {
    %c0 = arith.constant 0 : index
    %c0_0 = arith.constant 0 : index
    %0 = vector.load %arg3[%c0, %c0_0] : memref<6x128xf32, #tpu.memory_space<vmem>>, vector<6x128xf32>
    %c0_1 = arith.constant 0 : index
    %1 = memref.load %arg1[%c0_1] : memref<6xf32, #tpu.memory_space<smem>>
    %c0_2 = arith.constant 0 : index
    %2 = memref.load %arg2[%c0_2] : memref<6xf32, #tpu.memory_space<smem>>
    %3 = vector.extract_strided_slice %0 {offsets = [0, 0], sizes = [1, 128], strides = [1, 1]} : vector<6x128xf32> to vector<1x128xf32>
    %4 = vector.broadcast %2 : f32 to vector<1x128xf32>
    %5 = arith.mulf %4, %3 : vector<1x128xf32>
    %6 = vector.broadcast %1 : f32 to vector<1x128xf32>
    %7 = arith.addf %6, %5 : vector<1x128xf32>
    %cst = arith.constant 1.000000e-03 : f32
    %8 = vector.broadcast %cst : f32 to vector<1x128xf32>
    %9 = arith.maximumf %7, %8 : vector<1x128xf32>
    %c1 = arith.constant 1 : index
    %10 = memref.load %arg1[%c1] : memref<6xf32, #tpu.memory_space<smem>>
    %c1_3 = arith.constant 1 : index
    %11 = memref.load %arg2[%c1_3] : memref<6xf32, #tpu.memory_space<smem>>
    %12 = vector.extract_strided_slice %0 {offsets = [1, 0], sizes = [1, 128], strides = [1, 1]} : vector<6x128xf32> to vector<1x128xf32>
    %13 = vector.broadcast %11 : f32 to vector<1x128xf32>
    %14 = arith.mulf %13, %12 : vector<1x128xf32>
    %15 = vector.broadcast %10 : f32 to vector<1x128xf32>
    %16 = arith.addf %15, %14 : vector<1x128xf32>
    %cst_4 = arith.constant 1.000000e-03 : f32
    %17 = vector.broadcast %cst_4 : f32 to vector<1x128xf32>
    %18 = arith.maximumf %16, %17 : vector<1x128xf32>
    %c2 = arith.constant 2 : index
    %19 = memref.load %arg1[%c2] : memref<6xf32, #tpu.memory_space<smem>>
    %c2_5 = arith.constant 2 : index
    %20 = memref.load %arg2[%c2_5] : memref<6xf32, #tpu.memory_space<smem>>
    %21 = vector.extract_strided_slice %0 {offsets = [2, 0], sizes = [1, 128], strides = [1, 1]} : vector<6x128xf32> to vector<1x128xf32>
    %22 = vector.broadcast %20 : f32 to vector<1x128xf32>
    %23 = arith.mulf %22, %21 : vector<1x128xf32>
    %24 = vector.broadcast %19 : f32 to vector<1x128xf32>
    %25 = arith.addf %24, %23 : vector<1x128xf32>
    %cst_6 = arith.constant 1.000000e-03 : f32
    %26 = vector.broadcast %cst_6 : f32 to vector<1x128xf32>
    %27 = arith.maximumf %25, %26 : vector<1x128xf32>
    %c3 = arith.constant 3 : index
    %28 = memref.load %arg1[%c3] : memref<6xf32, #tpu.memory_space<smem>>
    %c3_7 = arith.constant 3 : index
    %29 = memref.load %arg2[%c3_7] : memref<6xf32, #tpu.memory_space<smem>>
    %30 = vector.extract_strided_slice %0 {offsets = [3, 0], sizes = [1, 128], strides = [1, 1]} : vector<6x128xf32> to vector<1x128xf32>
    %31 = vector.broadcast %29 : f32 to vector<1x128xf32>
    %32 = arith.mulf %31, %30 : vector<1x128xf32>
    %33 = vector.broadcast %28 : f32 to vector<1x128xf32>
    %34 = arith.addf %33, %32 : vector<1x128xf32>
    %cst_8 = arith.constant 0.0174532924 : f32
    %35 = vector.broadcast %cst_8 : f32 to vector<1x128xf32>
    %36 = arith.mulf %34, %35 : vector<1x128xf32>
    %c4 = arith.constant 4 : index
    %37 = memref.load %arg1[%c4] : memref<6xf32, #tpu.memory_space<smem>>
    %c4_9 = arith.constant 4 : index
    %38 = memref.load %arg2[%c4_9] : memref<6xf32, #tpu.memory_space<smem>>
    %39 = vector.extract_strided_slice %0 {offsets = [4, 0], sizes = [1, 128], strides = [1, 1]} : vector<6x128xf32> to vector<1x128xf32>
    %40 = vector.broadcast %38 : f32 to vector<1x128xf32>
    %41 = arith.mulf %40, %39 : vector<1x128xf32>
    %42 = vector.broadcast %37 : f32 to vector<1x128xf32>
    %43 = arith.addf %42, %41 : vector<1x128xf32>
    %cst_10 = arith.constant 0.0174532924 : f32
    %44 = vector.broadcast %cst_10 : f32 to vector<1x128xf32>
    %45 = arith.mulf %43, %44 : vector<1x128xf32>
    %c5 = arith.constant 5 : index
    %46 = memref.load %arg1[%c5] : memref<6xf32, #tpu.memory_space<smem>>
    %c5_11 = arith.constant 5 : index
    %47 = memref.load %arg2[%c5_11] : memref<6xf32, #tpu.memory_space<smem>>
    %48 = vector.extract_strided_slice %0 {offsets = [5, 0], sizes = [1, 128], strides = [1, 1]} : vector<6x128xf32> to vector<1x128xf32>
    %49 = vector.broadcast %47 : f32 to vector<1x128xf32>
    %50 = arith.mulf %49, %48 : vector<1x128xf32>
    %51 = vector.broadcast %46 : f32 to vector<1x128xf32>
    %52 = arith.addf %51, %50 : vector<1x128xf32>
    %cst_12 = arith.constant 0.0174532924 : f32
    %53 = vector.broadcast %cst_12 : f32 to vector<1x128xf32>
    %54 = arith.mulf %52, %53 : vector<1x128xf32>
    %55 = math.cos %36 : vector<1x128xf32>
    %56 = math.cos %45 : vector<1x128xf32>
    %57 = math.cos %54 : vector<1x128xf32>
    %58 = math.sin %54 : vector<1x128xf32>
    %59 = arith.mulf %55, %55 : vector<1x128xf32>
    %cst_13 = arith.constant 1.000000e+00 : f32
    %60 = vector.broadcast %cst_13 : f32 to vector<1x128xf32>
    %61 = arith.subf %60, %59 : vector<1x128xf32>
    %62 = arith.mulf %56, %56 : vector<1x128xf32>
    %63 = arith.subf %61, %62 : vector<1x128xf32>
    %64 = arith.mulf %57, %57 : vector<1x128xf32>
    %65 = arith.subf %63, %64 : vector<1x128xf32>
    %cst_14 = arith.constant 2.000000e+00 : f32
    %66 = vector.broadcast %cst_14 : f32 to vector<1x128xf32>
    %67 = arith.mulf %66, %55 : vector<1x128xf32>
    %68 = arith.mulf %67, %56 : vector<1x128xf32>
    %69 = arith.mulf %68, %57 : vector<1x128xf32>
    %70 = arith.addf %65, %69 : vector<1x128xf32>
    %cst_15 = arith.constant 1.000000e-03 : f32
    %71 = vector.broadcast %cst_15 : f32 to vector<1x128xf32>
    %72 = arith.maximumf %70, %71 : vector<1x128xf32>
    %73 = arith.mulf %9, %18 : vector<1x128xf32>
    %74 = arith.mulf %73, %27 : vector<1x128xf32>
    %75 = math.sqrt %72 : vector<1x128xf32>
    %76 = arith.mulf %74, %75 : vector<1x128xf32>
    %cst_16 = arith.constant 1.000000e-03 : f32
    %77 = vector.broadcast %cst_16 : f32 to vector<1x128xf32>
    %78 = arith.maximumf %76, %77 : vector<1x128xf32>
    %cst_17 = arith.constant 0.000000e+00 : f32
    %79 = vector.broadcast %cst_17 : f32 to vector<1x128xf32>
    %80 = arith.cmpf oge, %58, %79 : vector<1x128xf32>
    %cst_18 = arith.constant 1.000000e-03 : f32
    %81 = vector.broadcast %cst_18 : f32 to vector<1x128xf32>
    %82 = arith.maximumf %58, %81 : vector<1x128xf32>
    %cst_19 = arith.constant -1.000000e-03 : f32
    %83 = vector.broadcast %cst_19 : f32 to vector<1x128xf32>
    %84 = arith.minimumf %58, %83 : vector<1x128xf32>
    %85 = arith.select %80, %82, %84 : vector<1x128xi1>, vector<1x128xf32>
    %cst_20 = arith.constant 1.000000e+00 : f32
    %86 = vector.broadcast %cst_20 : f32 to vector<1x128xf32>
    %87 = arith.divf %86, %9 : vector<1x128xf32>
    %cst_21 = arith.constant 1.000000e+00 : f32
    %88 = vector.broadcast %cst_21 : f32 to vector<1x128xf32>
    %89 = arith.divf %88, %18 : vector<1x128xf32>
    %cst_22 = arith.constant 1.000000e+00 : f32
    %90 = vector.broadcast %cst_22 : f32 to vector<1x128xf32>
    %91 = arith.divf %90, %85 : vector<1x128xf32>
    %cst_23 = arith.constant 1.000000e+00 : f32
    %92 = vector.broadcast %cst_23 : f32 to vector<1x128xf32>
    %93 = arith.divf %92, %78 : vector<1x128xf32>
    %94 = arith.mulf %56, %57 : vector<1x128xf32>
    %95 = arith.subf %55, %94 : vector<1x128xf32>
    %96 = arith.mulf %18, %27 : vector<1x128xf32>
    %cst_24 = arith.constant 0.000000e+00 : f32
    %97 = vector.broadcast %cst_24 : f32 to vector<1x128xf32>
    %98 = arith.subf %97, %57 : vector<1x128xf32>
    %99 = arith.mulf %98, %87 : vector<1x128xf32>
    %100 = arith.mulf %99, %91 : vector<1x128xf32>
    %101 = arith.mulf %96, %57 : vector<1x128xf32>
    %102 = arith.mulf %101, %95 : vector<1x128xf32>
    %103 = arith.mulf %102, %91 : vector<1x128xf32>
    %104 = arith.mulf %96, %56 : vector<1x128xf32>
    %105 = arith.mulf %104, %85 : vector<1x128xf32>
    %106 = arith.subf %103, %105 : vector<1x128xf32>
    %107 = arith.mulf %106, %93 : vector<1x128xf32>
    %108 = arith.mulf %89, %91 : vector<1x128xf32>
    %109 = arith.mulf %9, %27 : vector<1x128xf32>
    %cst_25 = arith.constant 0.000000e+00 : f32
    %110 = vector.broadcast %cst_25 : f32 to vector<1x128xf32>
    %111 = arith.subf %110, %109 : vector<1x128xf32>
    %112 = arith.mulf %111, %95 : vector<1x128xf32>
    %113 = arith.mulf %112, %93 : vector<1x128xf32>
    %114 = arith.mulf %113, %91 : vector<1x128xf32>
    %115 = arith.mulf %9, %18 : vector<1x128xf32>
    %116 = arith.mulf %115, %85 : vector<1x128xf32>
    %117 = arith.mulf %116, %93 : vector<1x128xf32>
    %cst_26 = arith.constant 0.000000e+00 : f32
    %118 = vector.broadcast %cst_26 : f32 to vector<1x128xf32>
    %c0_27 = arith.constant 0 : index
    %c0_28 = arith.constant 0 : index
    %119 = vector.load %arg4[%c0_27, %c0_28] : memref<9x128xf32, #tpu.memory_space<vmem>>, vector<1x128xf32>
    tpu.vector_store %arg4[%c0_27, %c0_28], %87 {strides = array<i32>} : memref<9x128xf32, #tpu.memory_space<vmem>>, vector<1x128xf32>,
    %c1_29 = arith.constant 1 : index
    %c0_30 = arith.constant 0 : index
    %120 = vector.load %arg4[%c1_29, %c0_30] : memref<9x128xf32, #tpu.memory_space<vmem>>, vector<1x128xf32>
    tpu.vector_store %arg4[%c1_29, %c0_30], %118 {strides = array<i32>} : memref<9x128xf32, #tpu.memory_space<vmem>>, vector<1x128xf32>,
    %c2_31 = arith.constant 2 : index
    %c0_32 = arith.constant 0 : index
    %121 = vector.load %arg4[%c2_31, %c0_32] : memref<9x128xf32, #tpu.memory_space<vmem>>, vector<1x128xf32>
    tpu.vector_store %arg4[%c2_31, %c0_32], %118 {strides = array<i32>} : memref<9x128xf32, #tpu.memory_space<vmem>>, vector<1x128xf32>,
    %c3_33 = arith.constant 3 : index
    %c0_34 = arith.constant 0 : index
    %122 = vector.load %arg4[%c3_33, %c0_34] : memref<9x128xf32, #tpu.memory_space<vmem>>, vector<1x128xf32>
    tpu.vector_store %arg4[%c3_33, %c0_34], %100 {strides = array<i32>} : memref<9x128xf32, #tpu.memory_space<vmem>>, vector<1x128xf32>,
    %c4_35 = arith.constant 4 : index
    %c0_36 = arith.constant 0 : index
    %123 = vector.load %arg4[%c4_35, %c0_36] : memref<9x128xf32, #tpu.memory_space<vmem>>, vector<1x128xf32>
    tpu.vector_store %arg4[%c4_35, %c0_36], %108 {strides = array<i32>} : memref<9x128xf32, #tpu.memory_space<vmem>>, vector<1x128xf32>,
    %c5_37 = arith.constant 5 : index
    %c0_38 = arith.constant 0 : index
    %124 = vector.load %arg4[%c5_37, %c0_38] : memref<9x128xf32, #tpu.memory_space<vmem>>, vector<1x128xf32>
    tpu.vector_store %arg4[%c5_37, %c0_38], %118 {strides = array<i32>} : memref<9x128xf32, #tpu.memory_space<vmem>>, vector<1x128xf32>,
    %c6 = arith.constant 6 : index
    %c0_39 = arith.constant 0 : index
    %125 = vector.load %arg4[%c6, %c0_39] : memref<9x128xf32, #tpu.memory_space<vmem>>, vector<1x128xf32>
    tpu.vector_store %arg4[%c6, %c0_39], %107 {strides = array<i32>} : memref<9x128xf32, #tpu.memory_space<vmem>>, vector<1x128xf32>,
    %c7 = arith.constant 7 : index
    %c0_40 = arith.constant 0 : index
    %126 = vector.load %arg4[%c7, %c0_40] : memref<9x128xf32, #tpu.memory_space<vmem>>, vector<1x128xf32>
    tpu.vector_store %arg4[%c7, %c0_40], %114 {strides = array<i32>} : memref<9x128xf32, #tpu.memory_space<vmem>>, vector<1x128xf32>,
    %c8 = arith.constant 8 : index
    %c0_41 = arith.constant 0 : index
    %127 = vector.load %arg4[%c8, %c0_41] : memref<9x128xf32, #tpu.memory_space<vmem>>, vector<1x128xf32>
    tpu.vector_store %arg4[%c8, %c0_41], %117 {strides = array<i32>} : memref<9x128xf32, #tpu.memory_space<vmem>>, vector<1x128xf32>,
    return
  }
  func.func @transform_0(%arg0: i32) -> i32 {
    %c0_i32 = arith.constant 0 : i32
    %c0_i32_0 = arith.constant 0 : i32
    return %c0_i32 : i32
  }
  func.func @transform_1(%arg0: i32) -> i32 {
    %c0_i32 = arith.constant 0 : i32
    %c0_i32_0 = arith.constant 0 : i32
    return %c0_i32 : i32
  }
  func.func @transform_2(%arg0: i32) -> (i32, i32) {
    %c0_i32 = arith.constant 0 : i32
    %c0_i32_0 = arith.constant 0 : i32
    return %c0_i32, %arg0 : i32, i32
  }
  func.func @transform_3(%arg0: i32) -> (i32, i32) {
    %c0_i32 = arith.constant 0 : i32
    %c0_i32_0 = arith.constant 0 : i32
    return %c0_i32, %arg0 : i32, i32
  }
}

</mosaic_0001>

<llo_original>
// kernel: tpu_custom_call.1
$region0: #{tpu_custom_call.1}
  #allocation0 [shape = 'u32[]', space=smem, size = 0x4, offset = 0x4, fixed_abs, tag = 'smem constant byte address 0x4 - core index']
  #allocation1 [shape = 'u32[144,128]{1,0:T(1,128)}', space=vmem, size = 0x12000, scoped, tag = 'internal scratch']
  %s0 = inlined_call_operand.hbm [shape: f32[6], index: 0, kind: input, shape index: {}]
  %s1 = inlined_call_operand.vmem [shape: f32[6], index: 1, kind: input, shape index: {}]
  %s2 = inlined_call_operand.hbm [shape: f32[6,128], index: 2, kind: input, shape index: {}]
  %s3 = inlined_call_operand.hbm [shape: f32[9,128], index: 3, kind: output, shape index: {}]
  %s4 = sld [smem:[#allocation0]]
  $region34: #{tpu_custom_call.1} parent=0
    _
  %s6 = ssub.s32 1, %s4
  %s7 = scalar_select 0, %s6, %s4
  $region1: #{tpu_custom_call.1} parent=0
    #allocation2 [shape = 'u8[512]{0}', space=smem, size = 0x200, scoped, tag = 'input window, operand 0, single buffered']
    #allocation3 [shape = 's32[1]{0}', space=sflag, size = 0x4, scoped, tag = 'scoped memory for tpu_custom_call.1']
    #allocation4 [shape = 's32[1]{0}', space=sflag, size = 0x4, scoped, tag = 'scoped memory for tpu_custom_call.1']
    #allocation5 [shape = 's32[1]{0}', space=sflag, size = 0x4, scoped, tag = 'scoped memory for tpu_custom_call.1']
    #allocation6 [shape = 's32[1]{0}', space=sflag, size = 0x4, scoped, tag = 'scoped memory for tpu_custom_call.1']
    #allocation7 [shape = 'u8[512]{0}', space=smem, size = 0x200, scoped, tag = 'input window, operand 1, single buffered']
    #allocation8 [shape = 'u8[4096]{0}', space=vmem, size = 0x1000, scoped, tag = 'input window, operand 2, single buffered']
    #allocation9 [shape = 'u8[8192]{0}', space=vmem, size = 0x2000, scoped, tag = 'output window, operand 0, single buffered']
    %8 = vsyncpa [#allocation5], 0
    %9 = vsyncpa [#allocation6], 0
    %10 = vsyncpa [#allocation3], 0
    %11 = vsyncpa [#allocation4], 0
    // Predicated region
    $region2: #{tpu_custom_call.1} parent=1 // pred_check
      _
    $region3: #{tpu_custom_call.1} parent=1 // pred_check_branch
      %13 = sbr.rel (0) target = $region5
    $region4: #{tpu_custom_call.1} parent=1 // pred_region
      %s15 = ssub.s32 16, 16
      %16 = vsyncadd [#allocation5], %s15
      %19 = dma.hbm_to_smem %s0, 16, [#allocation2], [#allocation5]
    $region5: #{tpu_custom_call.1} parent=1 // pred_fallthru
      _
    // Predicated region
    $region6: #{tpu_custom_call.1} parent=1 // pred_check
      _
    $region7: #{tpu_custom_call.1} parent=1 // pred_check_branch
      %21 = sbr.rel (0) target = $region9
    $region8: #{tpu_custom_call.1} parent=1 // pred_region
      %s23 = ssub.s32 16, 16
      %24 = vsyncadd [#allocation6], %s23
      %s26 = sshll.u32 %s1, 4
      %s27 = int_to_ptr.vmem [resolvable:$true] %s26
      %29 = dma.vmem_to_smem %s27, 16, [#allocation7], [#allocation6]
    $region9: #{tpu_custom_call.1} parent=1 // pred_fallthru
      _
    // Predicated region
    $region10: #{tpu_custom_call.1} parent=1 // pred_check
      _
    $region11: #{tpu_custom_call.1} parent=1 // pred_check_branch
      %31 = sbr.rel (0) target = $region13
    $region12: #{tpu_custom_call.1} parent=1 // pred_region
      %s33 = ssub.s32 128, 128
      %34 = vsyncadd [#allocation3], %s33
      %s36 = sshll.u32 [#allocation8], 4
      %s37 = int_to_ptr.vmem [resolvable:$true] %s36
      %39 = dma.hbm_to_vmem [thread:$0]  %s2, 128, %s37, [#allocation3]
    $region13: #{tpu_custom_call.1} parent=1 // pred_fallthru
      _
    // Predicated region
    $region14: #{tpu_custom_call.1} parent=1 // pred_check
      _
    $region15: #{tpu_custom_call.1} parent=1 // pred_check_branch
      %41 = sbr.rel (0) target = $region17
    $region16: #{tpu_custom_call.1} parent=1 // pred_region
      %42 = dma.done [#allocation5], 16
    $region17: #{tpu_custom_call.1} parent=1 // pred_fallthru
      _
    // Predicated region
    $region18: #{tpu_custom_call.1} parent=1 // pred_check
      _
    $region19: #{tpu_custom_call.1} parent=1 // pred_check_branch
      %44 = sbr.rel (0) target = $region21
    $region20: #{tpu_custom_call.1} parent=1 // pred_region
      %45 = dma.done [#allocation6], 16
    $region21: #{tpu_custom_call.1} parent=1 // pred_fallthru
      _
    // Predicated region
    $region22: #{tpu_custom_call.1} parent=1 // pred_check
      _
    $region23: #{tpu_custom_call.1} parent=1 // pred_check_branch
      %47 = sbr.rel (0) target = $region25
    $region24: #{tpu_custom_call.1} parent=1 // pred_region
      %48 = dma.done [#allocation3], 128
    $region25: #{tpu_custom_call.1} parent=1 // pred_fallthru
      _
    %49 = sfence
    %v50 = vld [vmem:[#allocation8] sm:$0x3f]
    %s51 = sld [smem:[#allocation2]]
    %s52 = sld [smem:[#allocation7]]
    %v53 = vstv %s52
    %v54 = vmul.f32 %v53, %v50
    %v55 = vstv %s51
    %v56 = vadd.f32 %v55, %v54
    %v57 = vmax.f32 %v56, 0.001
    %s58 = sld [smem:[#allocation2 + $0x1]]
    %s59 = sld [smem:[#allocation7 + $0x1]]
    %v60 = vstv %s59
    %v61 = vmul.f32 %v60, %v50
    %v62 = vstv %s58
    %v63 = vadd.f32 %v62, %v61
    %v64 = vmax.f32 %v63, 0.001
    %s65 = sld [smem:[#allocation2 + $0x2]]
    %s66 = sld [smem:[#allocation7 + $0x2]]
    %v67 = vstv %s66
    %v68 = vmul.f32 %v67, %v50
    %v69 = vstv %s65
    %v70 = vadd.f32 %v69, %v68
    %v71 = vmax.f32 %v70, 0.001
    %s72 = sld [smem:[#allocation2 + $0x3]]
    %s73 = sld [smem:[#allocation7 + $0x3]]
    %v74 = vstv %s73
    %v75 = vmul.f32 %v74, %v50
    %v76 = vstv %s72
    %v77 = vadd.f32 %v76, %v75
    %v78 = vmul.f32 %v77, 0.017453292
    %s79 = sld [smem:[#allocation2 + $0x4]]
    %s80 = sld [smem:[#allocation7 + $0x4]]
    %v81 = vstv %s80
    %v82 = vmul.f32 %v81, %v50
    %v83 = vstv %s79
    %v84 = vadd.f32 %v83, %v82
    %v85 = vmul.f32 %v84, 0.017453292
    %s86 = sld [smem:[#allocation2 + $0x5]]
    %s87 = sld [smem:[#allocation7 + $0x5]]
    %v88 = vstv %s87
    %v89 = vmul.f32 %v88, %v50
    %v90 = vstv %s86
    %v91 = vadd.f32 %v90, %v89
    %v92 = vmul.f32 %v91, 0.017453292
    %v93 = vand.u32 2147483647, %v78
    %vm94 = vcmp.le.f32.partialorder %v93, 0.7853982
    %vm95 = vcmp.lt.s32.totalorder %v78, 0
    %v96 = vand.u32 %v78, 2139095040
    %v97 = vshrl.u32 %v96, 23
    %v98 = vsub.s32 %v97, 127
    %v99 = vand.u32 2147483647, %v78
    %v100 = vand.u32 %v99, 8388607
    %v101 = vor.u32 %v100, 8388608
    %v102 = vsub.s32 0, %v101
    %v103 = vadd.s32 %v98, 1
    %vm104 = vcmp.gt.s32.totalorder %v103, 0
    %v105 = vsel %vm104, %v103, 0
    %v106 = vshrl.u32 %v105, 5
    %v107 = vand.u32 %v105, 31
    %v108 = vsub.s32 32, %v107
    %v109 = vshrl.u32 683565275, %v108
    %v110 = vshll.u32 683565275, %v107
    %v111 = vshrl.u32 2475754826, %v108
    %v112 = vor.u32 %v110, %v111
    %v113 = vshll.u32 2475754826, %v107
    %v114 = vshrl.u32 2131351028, %v108
    %v115 = vor.u32 %v113, %v114
    %v116 = vshll.u32 2131351028, %v107
    %v117 = vshrl.u32 2102212464, %v108
    %v118 = vor.u32 %v116, %v117
    %v119 = vshll.u32 2102212464, %v107
    %v120 = vshrl.u32 920167782, %v108
    %v121 = vor.u32 %v119, %v120
    %v122 = vshll.u32 920167782, %v107
    %v123 = vshrl.u32 1326507024, %v108
    %v124 = vor.u32 %v122, %v123
    %vm125 = vcmp.lt.s32.totalorder %v106, 1
    %vm126 = vcmp.lt.s32.totalorder %v106, 2
    %vm127 = vcmp.lt.s32.totalorder %v106, 3
    %vm128 = vcmp.lt.s32.totalorder %v106, 4
    %v129 = vsel %vm125, %v109, %v112
    %v130 = vsel %vm128, %v118, 2102212464
    %v131 = vsel %vm127, %v115, %v130
    %v132 = vsel %vm126, %v129, %v131
    %v133 = vsel %vm125, %v112, %v115
    %v134 = vsel %vm128, %v121, 920167782
    %v135 = vsel %vm127, %v118, %v134
    %v136 = vsel %vm126, %v133, %v135
    %v137 = vsel %vm125, %v115, %v118
    %v138 = vsel %vm128, %v124, 1326507024
    %v139 = vsel %vm127, %v121, %v138
    %v140 = vsel %vm126, %v137, %v139
    %v141 = vshll.u32 %v101, 8
    %v142 = vmul.u32.u64.compose %v141, %v140
    %v143 = vextract.low.u32 %v142
    %v144 = vextract.high.u32 %v142
    %v145 = vmul.u32.u64.compose %v141, %v136
    %v146 = vextract.low.u32 %v145
    %v147 = vextract.high.u32 %v145
    %v148 = vmul.u32 %v141, %v132
    %v149 = vadd.s32 %v144, %v146
    %vm150 = vc.u32 %v144, %v146
    %v151 = vadd.s32 %v147, 1
    %v152 = vsel %vm150, %v151, %v147
    %v153 = vadd.s32 %v148, %v152
    %v154 = vadd.s32 %v153, 536870912
    %v155 = vshrl.u32 %v154, 30
    %v156 = vshll.u32 %v155, 30
    %v157 = vsub.s32 %v153, %v156
    %vm158 = vcmp.lt.s32.totalorder %v157, 0
    %v159 = vsub.s32 0, %v157
    %v160 = vsel %vm158, %v159, %v157
    %v161 = vclz %v160
    %v162 = vsub.s32 %v161, 2
    %vm163 = vcmp.gt.s32.totalorder 0, %v162
    %v164 = vsel %vm163, 0, %v162
    %v165 = vsub.s32 32, %v164
    %v166 = vshll.u32 %v157, %v164
    %v167 = vshrl.u32 %v149, %v165
    %v168 = vor.u32 %v166, %v167
    %v169 = vsub.s32 4294967266, %v164
    %v170 = vadd.s32 %v169, 127
    %v171 = vshll.u32 %v170, 23
    %v172 = vor.u32 4788187, %v171
    %v173 = vand.u32 2147483647, %v172
    %v175 = vcvt.s32.f32 %v168
    %v176 = vmul.f32 %v175, %v173
    %v177 = vxor.u32 %v176, 2147483648
    %v178 = vsel %vm95, %v177, %v176
    %v179 = vsub.s32 4, %v155
    %v180 = vsel %vm95, %v179, %v155
    %v181 = vsel %vm94, %v78, %v178
    %v182 = vsel %vm94, 0, %v180
    %v183 = vcosq.f32.pop %v181
    %v184 = vsinq.f32.pop %v181
    %vm185 = vweird.f32 %v78
    %v186 = vand.u32 %v182, 3
    %vm187 = vcmp.lt.s32.totalorder %v186, 2
    %vm188 = vcmp.eq.s32.totalorder %v186, 0
    %v189 = vxor.u32 %v184, 2147483648
    %v190 = vsel %vm188, %v183, %v189
    %vm191 = vcmp.eq.s32.totalorder %v186, 2
    %v192 = vxor.u32 %v183, 2147483648
    %v193 = vsel %vm191, %v192, %v184
    %v194 = vsel %vm187, %v190, %v193
    %v195 = vsel %vm185, nan, %v194
    %v196 = vand.u32 2147483647, %v85
    %vm197 = vcmp.le.f32.partialorder %v196, 0.7853982
    %vm198 = vcmp.lt.s32.totalorder %v85, 0
    %v199 = vand.u32 %v85, 2139095040
    %v200 = vshrl.u32 %v199, 23
    %v201 = vsub.s32 %v200, 127
    %v202 = vand.u32 2147483647, %v85
    %v203 = vand.u32 %v202, 8388607
    %v204 = vor.u32 %v203, 8388608
    %v205 = vsub.s32 0, %v204
    %v206 = vadd.s32 %v201, 1
    %vm207 = vcmp.gt.s32.totalorder %v206, 0
    %v208 = vsel %vm207, %v206, 0
    %v209 = vshrl.u32 %v208, 5
    %v210 = vand.u32 %v208, 31
    %v211 = vsub.s32 32, %v210
    %v212 = vshrl.u32 683565275, %v211
    %v213 = vshll.u32 683565275, %v210
    %v214 = vshrl.u32 2475754826, %v211
    %v215 = vor.u32 %v213, %v214
    %v216 = vshll.u32 2475754826, %v210
    %v217 = vshrl.u32 2131351028, %v211
    %v218 = vor.u32 %v216, %v217
    %v219 = vshll.u32 2131351028, %v210
    %v220 = vshrl.u32 2102212464, %v211
    %v221 = vor.u32 %v219, %v220
    %v222 = vshll.u32 2102212464, %v210
    %v223 = vshrl.u32 920167782, %v211
    %v224 = vor.u32 %v222, %v223
    %v225 = vshll.u32 920167782, %v210
    %v226 = vshrl.u32 1326507024, %v211
    %v227 = vor.u32 %v225, %v226
    %vm228 = vcmp.lt.s32.totalorder %v209, 1
    %vm229 = vcmp.lt.s32.totalorder %v209, 2
    %vm230 = vcmp.lt.s32.totalorder %v209, 3
    %vm231 = vcmp.lt.s32.totalorder %v209, 4
    %v232 = vsel %vm228, %v212, %v215
    %v233 = vsel %vm231, %v221, 2102212464
    %v234 = vsel %vm230, %v218, %v233
    %v235 = vsel %vm229, %v232, %v234
    %v236 = vsel %vm228, %v215, %v218
    %v237 = vsel %vm231, %v224, 920167782
    %v238 = vsel %vm230, %v221, %v237
    %v239 = vsel %vm229, %v236, %v238
    %v240 = vsel %vm228, %v218, %v221
    %v241 = vsel %vm231, %v227, 1326507024
    %v242 = vsel %vm230, %v224, %v241
    %v243 = vsel %vm229, %v240, %v242
    %v244 = vshll.u32 %v204, 8
    %v245 = vmul.u32.u64.compose %v244, %v243
    %v246 = vextract.low.u32 %v245
    %v247 = vextract.high.u32 %v245
    %v248 = vmul.u32.u64.compose %v244, %v239
    %v249 = vextract.low.u32 %v248
    %v250 = vextract.high.u32 %v248
    %v251 = vmul.u32 %v244, %v235
    %v252 = vadd.s32 %v247, %v249
    %vm253 = vc.u32 %v247, %v249
    %v254 = vadd.s32 %v250, 1
    %v255 = vsel %vm253, %v254, %v250
    %v256 = vadd.s32 %v251, %v255
    %v257 = vadd.s32 %v256, 536870912
    %v258 = vshrl.u32 %v257, 30
    %v259 = vshll.u32 %v258, 30
    %v260 = vsub.s32 %v256, %v259
    %vm261 = vcmp.lt.s32.totalorder %v260, 0
    %v262 = vsub.s32 0, %v260
    %v263 = vsel %vm261, %v262, %v260
    %v264 = vclz %v263
    %v265 = vsub.s32 %v264, 2
    %vm266 = vcmp.gt.s32.totalorder 0, %v265
    %v267 = vsel %vm266, 0, %v265
    %v268 = vsub.s32 32, %v267
    %v269 = vshll.u32 %v260, %v267
    %v270 = vshrl.u32 %v252, %v268
    %v271 = vor.u32 %v269, %v270
    %v272 = vsub.s32 4294967266, %v267
    %v273 = vadd.s32 %v272, 127
    %v274 = vshll.u32 %v273, 23
    %v275 = vor.u32 4788187, %v274
    %v276 = vand.u32 2147483647, %v275
    %v278 = vcvt.s32.f32 %v271
    %v279 = vmul.f32 %v278, %v276
    %v280 = vxor.u32 %v279, 2147483648
    %v281 = vsel %vm198, %v280, %v279
    %v282 = vsub.s32 4, %v258
    %v283 = vsel %vm198, %v282, %v258
    %v284 = vsel %vm197, %v85, %v281
    %v285 = vsel %vm197, 0, %v283
    %v286 = vcosq.f32.pop %v284
    %v287 = vsinq.f32.pop %v284
    %vm288 = vweird.f32 %v85
    %v289 = vand.u32 %v285, 3
    %vm290 = vcmp.lt.s32.totalorder %v289, 2
    %vm291 = vcmp.eq.s32.totalorder %v289, 0
    %v292 = vxor.u32 %v287, 2147483648
    %v293 = vsel %vm291, %v286, %v292
    %vm294 = vcmp.eq.s32.totalorder %v289, 2
    %v295 = vxor.u32 %v286, 2147483648
    %v296 = vsel %vm294, %v295, %v287
    %v297 = vsel %vm290, %v293, %v296
    %v298 = vsel %vm288, nan, %v297
    %v299 = vand.u32 2147483647, %v92
    %vm300 = vcmp.le.f32.partialorder %v299, 0.7853982
    %vm301 = vcmp.lt.s32.totalorder %v92, 0
    %v302 = vand.u32 %v92, 2139095040
    %v303 = vshrl.u32 %v302, 23
    %v304 = vsub.s32 %v303, 127
    %v305 = vand.u32 2147483647, %v92
    %v306 = vand.u32 %v305, 8388607
    %v307 = vor.u32 %v306, 8388608
    %v308 = vsub.s32 0, %v307
    %v309 = vadd.s32 %v304, 1
    %vm310 = vcmp.gt.s32.totalorder %v309, 0
    %v311 = vsel %vm310, %v309, 0
    %v312 = vshrl.u32 %v311, 5
    %v313 = vand.u32 %v311, 31
    %v314 = vsub.s32 32, %v313
    %v315 = vshrl.u32 683565275, %v314
    %v316 = vshll.u32 683565275, %v313
    %v317 = vshrl.u32 2475754826, %v314
    %v318 = vor.u32 %v316, %v317
    %v319 = vshll.u32 2475754826, %v313
    %v320 = vshrl.u32 2131351028, %v314
    %v321 = vor.u32 %v319, %v320
    %v322 = vshll.u32 2131351028, %v313
    %v323 = vshrl.u32 2102212464, %v314
    %v324 = vor.u32 %v322, %v323
    %v325 = vshll.u32 2102212464, %v313
    %v326 = vshrl.u32 920167782, %v314
    %v327 = vor.u32 %v325, %v326
    %v328 = vshll.u32 920167782, %v313
    %v329 = vshrl.u32 1326507024, %v314
    %v330 = vor.u32 %v328, %v329
    %vm331 = vcmp.lt.s32.totalorder %v312, 1
    %vm332 = vcmp.lt.s32.totalorder %v312, 2
    %vm333 = vcmp.lt.s32.totalorder %v312, 3
    %vm334 = vcmp.lt.s32.totalorder %v312, 4
    %v335 = vsel %vm331, %v315, %v318
    %v336 = vsel %vm334, %v324, 2102212464
    %v337 = vsel %vm333, %v321, %v336
    %v338 = vsel %vm332, %v335, %v337
    %v339 = vsel %vm331, %v318, %v321
    %v340 = vsel %vm334, %v327, 920167782
    %v341 = vsel %vm333, %v324, %v340
    %v342 = vsel %vm332, %v339, %v341
    %v343 = vsel %vm331, %v321, %v324
    %v344 = vsel %vm334, %v330, 1326507024
    %v345 = vsel %vm333, %v327, %v344
    %v346 = vsel %vm332, %v343, %v345
    %v347 = vshll.u32 %v307, 8
    %v348 = vmul.u32.u64.compose %v347, %v346
    %v349 = vextract.low.u32 %v348
    %v350 = vextract.high.u32 %v348
    %v351 = vmul.u32.u64.compose %v347, %v342
    %v352 = vextract.low.u32 %v351
    %v353 = vextract.high.u32 %v351
    %v354 = vmul.u32 %v347, %v338
    %v355 = vadd.s32 %v350, %v352
    %vm356 = vc.u32 %v350, %v352
    %v357 = vadd.s32 %v353, 1
    %v358 = vsel %vm356, %v357, %v353
    %v359 = vadd.s32 %v354, %v358
    %v360 = vadd.s32 %v359, 536870912
    %v361 = vshrl.u32 %v360, 30
    %v362 = vshll.u32 %v361, 30
    %v363 = vsub.s32 %v359, %v362
    %vm364 = vcmp.lt.s32.totalorder %v363, 0
    %v365 = vsub.s32 0, %v363
    %v366 = vsel %vm364, %v365, %v363
    %v367 = vclz %v366
    %v368 = vsub.s32 %v367, 2
    %vm369 = vcmp.gt.s32.totalorder 0, %v368
    %v370 = vsel %vm369, 0, %v368
    %v371 = vsub.s32 32, %v370
    %v372 = vshll.u32 %v363, %v370
    %v373 = vshrl.u32 %v355, %v371
    %v374 = vor.u32 %v372, %v373
    %v375 = vsub.s32 4294967266, %v370
    %v376 = vadd.s32 %v375, 127
    %v377 = vshll.u32 %v376, 23
    %v378 = vor.u32 4788187, %v377
    %v379 = vand.u32 2147483647, %v378
    %v381 = vcvt.s32.f32 %v374
    %v382 = vmul.f32 %v381, %v379
    %v383 = vxor.u32 %v382, 2147483648
    %v384 = vsel %vm301, %v383, %v382
    %v385 = vsub.s32 4, %v361
    %v386 = vsel %vm301, %v385, %v361
    %v387 = vsel %vm300, %v92, %v384
    %v388 = vsel %vm300, 0, %v386
    %v389 = vcosq.f32.pop %v387
    %v390 = vsinq.f32.pop %v387
    %vm391 = vweird.f32 %v92
    %v392 = vand.u32 %v388, 3
    %vm393 = vcmp.lt.s32.totalorder %v392, 2
    %vm394 = vcmp.eq.s32.totalorder %v392, 0
    %v395 = vxor.u32 %v390, 2147483648
    %v396 = vsel %vm394, %v389, %v395
    %vm397 = vcmp.eq.s32.totalorder %v392, 2
    %v398 = vxor.u32 %v389, 2147483648
    %v399 = vsel %vm397, %v398, %v390
    %v400 = vsel %vm393, %v396, %v399
    %v401 = vsel %vm391, nan, %v400
    %v402 = vand.u32 2147483647, %v92
    %vm403 = vcmp.le.f32.partialorder %v402, 0.7853982
    %vm404 = vcmp.lt.s32.totalorder %v92, 0
    %v405 = vand.u32 %v92, 2139095040
    %v406 = vshrl.u32 %v405, 23
    %v407 = vsub.s32 %v406, 127
    %v408 = vand.u32 2147483647, %v92
    %v409 = vand.u32 %v408, 8388607
    %v410 = vor.u32 %v409, 8388608
    %v411 = vsub.s32 0, %v410
    %v412 = vadd.s32 %v407, 1
    %vm413 = vcmp.gt.s32.totalorder %v412, 0
    %v414 = vsel %vm413, %v412, 0
    %v415 = vshrl.u32 %v414, 5
    %v416 = vand.u32 %v414, 31
    %v417 = vsub.s32 32, %v416
    %v418 = vshrl.u32 683565275, %v417
    %v419 = vshll.u32 683565275, %v416
    %v420 = vshrl.u32 2475754826, %v417
    %v421 = vor.u32 %v419, %v420
    %v422 = vshll.u32 2475754826, %v416
    %v423 = vshrl.u32 2131351028, %v417
    %v424 = vor.u32 %v422, %v423
    %v425 = vshll.u32 2131351028, %v416
    %v426 = vshrl.u32 2102212464, %v417
    %v427 = vor.u32 %v425, %v426
    %v428 = vshll.u32 2102212464, %v416
    %v429 = vshrl.u32 920167782, %v417
    %v430 = vor.u32 %v428, %v429
    %v431 = vshll.u32 920167782, %v416
    %v432 = vshrl.u32 1326507024, %v417
    %v433 = vor.u32 %v431, %v432
    %vm434 = vcmp.lt.s32.totalorder %v415, 1
    %vm435 = vcmp.lt.s32.totalorder %v415, 2
    %vm436 = vcmp.lt.s32.totalorder %v415, 3
    %vm437 = vcmp.lt.s32.totalorder %v415, 4
    %v438 = vsel %vm434, %v418, %v421
    %v439 = vsel %vm437, %v427, 2102212464
    %v440 = vsel %vm436, %v424, %v439
    %v441 = vsel %vm435, %v438, %v440
    %v442 = vsel %vm434, %v421, %v424
    %v443 = vsel %vm437, %v430, 920167782
    %v444 = vsel %vm436, %v427, %v443
    %v445 = vsel %vm435, %v442, %v444
    %v446 = vsel %vm434, %v424, %v427
    %v447 = vsel %vm437, %v433, 1326507024
    %v448 = vsel %vm436, %v430, %v447
    %v449 = vsel %vm435, %v446, %v448
    %v450 = vshll.u32 %v410, 8
    %v451 = vmul.u32.u64.compose %v450, %v449
    %v452 = vextract.low.u32 %v451
    %v453 = vextract.high.u32 %v451
    %v454 = vmul.u32.u64.compose %v450, %v445
    %v455 = vextract.low.u32 %v454
    %v456 = vextract.high.u32 %v454
    %v457 = vmul.u32 %v450, %v441
    %v458 = vadd.s32 %v453, %v455
    %vm459 = vc.u32 %v453, %v455
    %v460 = vadd.s32 %v456, 1
    %v461 = vsel %vm459, %v460, %v456
    %v462 = vadd.s32 %v457, %v461
    %v463 = vadd.s32 %v462, 536870912
    %v464 = vshrl.u32 %v463, 30
    %v465 = vshll.u32 %v464, 30
    %v466 = vsub.s32 %v462, %v465
    %vm467 = vcmp.lt.s32.totalorder %v466, 0
    %v468 = vsub.s32 0, %v466
    %v469 = vsel %vm467, %v468, %v466
    %v470 = vclz %v469
    %v471 = vsub.s32 %v470, 2
    %vm472 = vcmp.gt.s32.totalorder 0, %v471
    %v473 = vsel %vm472, 0, %v471
    %v474 = vsub.s32 32, %v473
    %v475 = vshll.u32 %v466, %v473
    %v476 = vshrl.u32 %v458, %v474
    %v477 = vor.u32 %v475, %v476
    %v478 = vsub.s32 4294967266, %v473
    %v479 = vadd.s32 %v478, 127
    %v480 = vshll.u32 %v479, 23
    %v481 = vor.u32 4788187, %v480
    %v482 = vand.u32 2147483647, %v481
    %v484 = vcvt.s32.f32 %v477
    %v485 = vmul.f32 %v484, %v482
    %v486 = vxor.u32 %v485, 2147483648
    %v487 = vsel %vm404, %v486, %v485
    %v488 = vsub.s32 4, %v464
    %v489 = vsel %vm404, %v488, %v464
    %v490 = vsel %vm403, %v92, %v487
    %v491 = vsel %vm403, 0, %v489
    %v492 = vcosq.f32.pop %v490
    %v493 = vsinq.f32.pop %v490
    %vm494 = vweird.f32 %v92
    %v495 = vadd.s32 %v491, 3
    %v496 = vand.u32 %v495, 3
    %vm497 = vcmp.lt.s32.totalorder %v496, 2
    %vm498 = vcmp.eq.s32.totalorder %v496, 0
    %v499 = vxor.u32 %v493, 2147483648
    %v500 = vsel %vm498, %v492, %v499
    %vm501 = vcmp.eq.s32.totalorder %v496, 2
    %v502 = vxor.u32 %v492, 2147483648
    %v503 = vsel %vm501, %v502, %v493
    %v504 = vsel %vm497, %v500, %v503
    %v505 = vsel %vm494, nan, %v504
    %v506 = vmul.f32 %v195, %v195
    %v507 = vsub.f32 1.0, %v506
    %v508 = vmul.f32 %v298, %v298
    %v510 = vrot.slane %v508, 1
    %v512 = vsub.f32 %v507, %v510
    %v513 = vmul.f32 %v401, %v401
    %v515 = vrot.slane %v513, 2
    %v517 = vsub.f32 %v512, %v515
    %v518 = vmul.f32 %v195, 2.0
    %v520 = vrot.slane %v298, 1
    %v522 = vmul.f32 %v518, %v520
    %v524 = vrot.slane %v401, 2
    %v526 = vmul.f32 %v522, %v524
    %v527 = vadd.f32 %v517, %v526
    %v528 = vmax.f32 %v527, 0.001
    %v530 = vrot.slane %v64, 1
    %v532 = vmul.f32 %v57, %v530
    %v534 = vrot.slane %v71, 2
    %v536 = vmul.f32 %v532, %v534
    %v537 = vrsqrt.pop %v528
    %v538 = vmul.f32 %v528, %v537
    %vm539 = vcmp.eq.f32.partialorder %v528, inf
    %v540 = vsel %vm539, %v528, %v538
    %vm541 = vcmp.eq.f32.partialorder %v528, 0.0
    %v542 = vand.u32 %v528, 2147483648
    %v543 = vsel %vm541, %v542, %v540
    %v545 = vrot.slane %v543, 3
    %v547 = vmul.f32 %v536, %v545
    %v548 = vmax.f32 %v547, 0.001
    %vm549 = vcmp.ge.f32.partialorder %v505, 0.0
    %v550 = vmax.f32 %v505, 0.001
    %v551 = vmin.f32 %v505, -0.001
    %v552 = vsel %vm549, %v550, %v551
    %v553 = vrcp.pop %v57
    %v554 = vmul.f32 1.0, %v553
    %v555 = vrcp.pop %v64
    %v556 = vmul.f32 1.0, %v555
    %v557 = vrcp.pop %v552
    %v558 = vmul.f32 1.0, %v557
    %v559 = vrcp.pop %v548
    %v560 = vmul.f32 1.0, %v559
    %v561 = vrot.slane %v401, 1
    %v563 = vmul.f32 %v298, %v561
    %v565 = vrot.slane %v563, 1
    %v567 = vsub.f32 %v195, %v565
    %v568 = vrot.slane %v71, 1
    %v570 = vmul.f32 %v64, %v568
    %v571 = vsub.f32 0.0, %v401
    %v573 = vrot.slane %v554, 3
    %v575 = vmul.f32 %v571, %v573
    %v576 = vmul.f32 %v575, %v558
    %v577 = vrot.slane %v401, 4
    %v579 = vmul.f32 %v570, %v577
    %v581 = vrot.slane %v567, 2
    %v583 = vmul.f32 %v579, %v581
    %v585 = vrot.slane %v558, 4
    %v587 = vmul.f32 %v583, %v585
    %v588 = vrot.slane %v298, 3
    %v590 = vmul.f32 %v570, %v588
    %v592 = vrot.slane %v552, 4
    %v594 = vmul.f32 %v590, %v592
    %v595 = vsub.f32 %v587, %v594
    %v597 = vrot.slane %v560, 7
    %v599 = vmul.f32 %v595, %v597
    %v600 = vmul.f32 %v556, %v585
    %v601 = vmul.f32 %v57, %v534
    %v602 = vsub.f32 0.0, %v601
    %v603 = vrot.slane %v567, 3
    %v605 = vmul.f32 %v602, %v603
    %v606 = vmul.f32 %v605, %v560
    %v607 = vrot.slane %v558, 5
    %v609 = vmul.f32 %v606, %v607
    %v610 = vrot.slane %v552, 5
    %v612 = vmul.f32 %v532, %v610
    %v613 = vmul.f32 %v612, %v560
    %614 = vst [vmem:[#allocation9] sm:$0x1] %v554
    %615 = vst [vmem:[#allocation9 + $0x1] sm:$0x1] 0.0
    %616 = vst [vmem:[#allocation9 + $0x2] sm:$0x1] 0.0
    %617 = vst [vmem:[#allocation9 - $0x2] sm:$0x20] %v576
    %618 = vst [vmem:[#allocation9 + $0x3] sm:$0x2] %v600
    %619 = vst [vmem:[#allocation9 + $0x5] sm:$0x1] 0.0
    %620 = vst [vmem:[#allocation9 + $0x5] sm:$0x2] %v599
    %621 = vst [vmem:[#allocation9 + $0x7] sm:$0x1] %v609
    %622 = vst [vmem:[#allocation9 + $0x8] sm:$0x1] %v613
    // Predicated region
    $region26: #{tpu_custom_call.1} parent=1 // pred_check
      _
    $region27: #{tpu_custom_call.1} parent=1 // pred_check_branch
      %624 = sbr.rel (0) target = $region29
    $region28: #{tpu_custom_call.1} parent=1 // pred_region
      %s626 = ssub.s32 256, 256
      %627 = vsyncadd [#allocation4], %s626
      %s628 = sshll.u32 [#allocation9], 4
      %s629 = int_to_ptr.vmem [resolvable:$true] %s628
      %634 = dma.vmem_to_hbm [thread:$0]  %s629, 256, %s3, [#allocation4], 128, 128, 8
    $region29: #{tpu_custom_call.1} parent=1 // pred_fallthru
      _
    // Predicated region
    $region30: #{tpu_custom_call.1} parent=1 // pred_check
      _
    $region31: #{tpu_custom_call.1} parent=1 // pred_check_branch
      %636 = sbr.rel (0) target = $region33
    $region32: #{tpu_custom_call.1} parent=1 // pred_region
      %637 = dma.done [#allocation4], 256
    $region33: #{tpu_custom_call.1} parent=1 // pred_fallthru
      _
    %638 = vsyncpa [#allocation3], 1
    %639 = vsyncpa [#allocation4], 1
    %640 = vsyncpa [#allocation5], 1
    %641 = vsyncpa [#allocation6], 1

</llo_original>
